<compile_context>
chip_gen: v7x
topology: tpu7x:2x2x1
jax: 0.10.0
libtpu: 0.0.40
codegen_flags: <defaults>
</compile_context>

<pallas_src>
import functools
import math

import jax
import jax.numpy as jnp
from jax import lax
from jax.experimental import pallas as pl
from jax.experimental.pallas import tpu as pltpu


MIN_A = -2.0
MAX_A = 2.0
LANE = 128                      # lane width: all feature dims padded to this
GSUB = 16                       # graph-count padding (bf16-safe sublane packing)
_PROJ_RESIDENT_BYTES = 24 * 1024 * 1024   # v7x-safe VMEM residency budget
_VMEM_LIMIT = 48 * 1024 * 1024            # safe ceiling across v5e/v6e/v7x


def _round_up(x, m):
    return ((x + m - 1) // m) * m


def _pad2(a, rows, cols):
    r, c = a.shape
    return jnp.pad(a, ((0, rows - r), (0, cols - c)))


# ---------------------------------------------------------------------------
# Kernel 1: tiled A_hat aggregation with f32 accumulator.
#   acc[i] = sum_k adj[i,k] @ proj[k]          (adj int8 -> bf16 in-kernel)
#   epilogue: h = acc * dinv[i] + bias ; optional ReLU ;
#             optional fused next-layer projection (h @ W_next) * dinv[i]
# ---------------------------------------------------------------------------
def _gcn_agg_kernel(adj_ref, proj_ref, dinv_ref, bias_ref, w_next_ref,
                    out_ref, acc_ref, *, tile_k, resident, relu, fuse_next):
    k = pl.program_id(1)

    @pl.when(k == 0)
    def _():
        acc_ref[...] = jnp.zeros_like(acc_ref)

    if resident:
        start = pl.multiple_of(k * tile_k, tile_k)
        p = proj_ref[pl.ds(start, tile_k), :]          # slice resident proj
    else:
        p = proj_ref[...]                              # streamed per-k tile
    a = adj_ref[...].astype(jnp.bfloat16)              # int8 -> bf16 (free VPU)
    acc_ref[...] += jnp.dot(a, p, preferred_element_type=jnp.float32)

    @pl.when(k == pl.num_programs(1) - 1)
    def _():
        dinv = dinv_ref[...]                           # (tile_m, 1) f32
        h = acc_ref[...] * dinv + bias_ref[...]
        if relu:
            h = jnp.maximum(h, 0.0)
        if fuse_next:
            # Next layer's column-scaled projection: dinv[i] * (h1[i] @ W2)
            h = jnp.dot(h.astype(jnp.bfloat16), w_next_ref[...],
                        preferred_element_type=jnp.float32) * dinv
        out_ref[...] = h.astype(out_ref.dtype)


def _gcn_aggregate(adj, proj, dinv, bias, w_next, *, tile_m, tile_k,
                   resident, relu, fuse_next, out_dtype):
    n_pad = adj.shape[0]
    h_pad = proj.shape[1]
    gm, gk = n_pad // tile_m, n_pad // tile_k

    if resident:
        proj_spec = pl.BlockSpec((n_pad, h_pad), lambda i, k: (0, 0))
    else:
        proj_spec = pl.BlockSpec((tile_k, h_pad), lambda i, k: (k, 0))

    flops = 2 * n_pad * n_pad * h_pad
    if fuse_next:
        flops += 2 * n_pad * h_pad * h_pad
    proj_reads = 1 if resident else gm
    bytes_accessed = int(
        adj.size * adj.dtype.itemsize
        + proj.size * proj.dtype.itemsize * proj_reads
        + n_pad * h_pad * jnp.dtype(out_dtype).itemsize)

    kernel = functools.partial(_gcn_agg_kernel, tile_k=tile_k,
                               resident=resident, relu=relu,
                               fuse_next=fuse_next)
    return pl.pallas_call(
        kernel,
        out_shape=jax.ShapeDtypeStruct((n_pad, h_pad), out_dtype),
        grid_spec=pltpu.PrefetchScalarGridSpec(
            num_scalar_prefetch=0,
            grid=(gm, gk),
            in_specs=[
                pl.BlockSpec((tile_m, tile_k), lambda i, k: (i, k)),   # adj i8
                proj_spec,                                             # proj bf16
                pl.BlockSpec((tile_m, 1), lambda i, k: (i, 0)),        # dinv f32
                pl.BlockSpec((1, h_pad), lambda i, k: (0, 0)),         # bias f32
                pl.BlockSpec((h_pad, h_pad), lambda i, k: (0, 0)),     # W_next bf16
            ],
            out_specs=pl.BlockSpec((tile_m, h_pad), lambda i, k: (i, 0)),
            scratch_shapes=[pltpu.VMEM((tile_m, h_pad), jnp.float32)],
        ),
        compiler_params=pltpu.CompilerParams(
            dimension_semantics=("parallel", "arbitrary"),
            vmem_limit_bytes=_VMEM_LIMIT),
        cost_estimate=pl.CostEstimate(
            flops=flops, transcendentals=0, bytes_accessed=bytes_accessed),
    )(adj, proj, dinv, bias, w_next)


# ---------------------------------------------------------------------------
# Kernel 2: mean-pool accumulation over node tiles + fused MLP head + transform
# ---------------------------------------------------------------------------
def _pool_head_kernel(pool_ref, invc_ref, h2_ref,
                      wf1_ref, bf1_ref, wf2_ref, bf2_ref, wf3_ref, bf3_ref,
                      out_ref, acc_ref, *, min_a, max_a):
    k = pl.program_id(0)

    @pl.when(k == 0)
    def _():
        acc_ref[...] = jnp.zeros_like(acc_ref)

    acc_ref[...] += jnp.dot(pool_ref[...], h2_ref[...],
                            preferred_element_type=jnp.float32)

    @pl.when(k == pl.num_programs(0) - 1)
    def _():
        g = acc_ref[...] * invc_ref[...]                   # (G_pad, H_pad) f32
        z = jnp.dot(g, wf1_ref[...],
                    preferred_element_type=jnp.float32) + bf1_ref[...]
        z = jnp.where(z > 0, z, 0.1 * z)                   # LeakyReLU(0.1)
        z = jnp.dot(z, wf2_ref[...],
                    preferred_element_type=jnp.float32) + bf2_ref[...]
        z = jnp.where(z > 0, z, 0.1 * z)
        z = jnp.dot(z, wf3_ref[...],
                    preferred_element_type=jnp.float32) + bf3_ref[...]
        # column 0: sigmoid * (max-min) + min ; columns 1,2 pass through.
        col = lax.broadcasted_iota(jnp.int32, z.shape, 1)
        a_all = jax.nn.sigmoid(z) * (max_a - min_a) + min_a
        out_ref[...] = jnp.where(col == 0, a_all, z)       # lane-dense (G_pad,128)


def _pool_head(pool, inv_counts, h2, mlp_params, tile_n, *, min_a, max_a):
    g_pad, n_pad = pool.shape
    h_pad = h2.shape[1]
    wf1, bf1, wf2, bf2, wf3, bf3 = mlp_params

    def full(a):
        return pl.BlockSpec(a.shape, lambda k, _nd=a.ndim: (0,) * _nd)

    kernel = functools.partial(_pool_head_kernel, min_a=min_a, max_a=max_a)
    return pl.pallas_call(
        kernel,
        out_shape=jax.ShapeDtypeStruct((g_pad, LANE), jnp.float32),
        grid_spec=pltpu.PrefetchScalarGridSpec(
            num_scalar_prefetch=0,
            grid=(n_pad // tile_n,),
            in_specs=[
                pl.BlockSpec((g_pad, tile_n), lambda k: (0, k)),   # pool bf16
                full(inv_counts),                                  # 1/count f32
                pl.BlockSpec((tile_n, h_pad), lambda k: (k, 0)),   # h2 bf16
                full(wf1), full(bf1), full(wf2), full(bf2), full(wf3), full(bf3),
            ],
            out_specs=pl.BlockSpec((g_pad, LANE), lambda k: (0, 0)),
            scratch_shapes=[pltpu.VMEM((g_pad, h_pad), jnp.float32)],
        ),
        compiler_params=pltpu.CompilerParams(
            dimension_semantics=("arbitrary",),
            vmem_limit_bytes=_VMEM_LIMIT),
    )(pool, inv_counts, h2, wf1, bf1, wf2, bf2, wf3, bf3)


# ---------------------------------------------------------------------------
# Forward wrapper
# ---------------------------------------------------------------------------
def mem_gnn_forward(x, edge_index, batch, params, num_graphs,
                    min_a=MIN_A, max_a=MAX_A, tile_m=512, tile_k=256):
    """x: [N, input_dim] f32, edge_index: [2, E] i32, batch: [N] i32."""
    n, _ = x.shape
    (w1, b1, w2, b2, wf1, bf1, wf2, bf2, wf3, bf3) = params
    hidden = w1.shape[1]
    h_pad = _round_up(hidden, LANE)

    n_pad = _round_up(max(n, 256), 256)
    tile_m = min(tile_m, n_pad)
    tile_k = min(tile_k, n_pad)
    n_pad = _round_up(n_pad, math.lcm(tile_m, tile_k))
    g_pad = _round_up(max(num_graphs, 1), GSUB)

    # ---- dense adjacency (int8 edge counts) + symmetric normalization (f32).
    # Matches PyG gcn_norm/add_remaining_self_loops for unit edge weights:
    # existing self loops are kept, a unit self loop is added only where absent.
    src = edge_index[0].astype(jnp.int32)
    dst = edge_index[1].astype(jnp.int32)
    adj = jnp.zeros((n_pad, n_pad), jnp.float32).at[dst, src].add(1.0)
    real = jnp.arange(n_pad) < n
    diag = jnp.diagonal(adj)
    adj = adj + jnp.diag(jnp.where(real & (diag == 0.0), 1.0, 0.0))
    deg = jnp.sum(adj, axis=1)
    dinv = jnp.where(deg > 0, lax.rsqrt(deg), 0.0)          # (n_pad,) f32
    adj_i8 = adj.astype(jnp.int8)                           # 1 B/elem HBM stream
    dinv_col = dinv[:, None]                                # (n_pad, 1) f32

    # ---- layer-1 projection in plain JAX (tiny (N,f)@(f,hidden) GEMM); fold
    # the column normalization dinv[k] into the projected rows.
    proj1 = _pad2(jnp.dot(x, w1) * dinv[:n, None], n_pad, h_pad).astype(jnp.bfloat16)

    b1_p = _pad2(b1, 1, h_pad)                              # f32
    b2_p = _pad2(b2, 1, h_pad)                              # f32
    w2_p = _pad2(w2, h_pad, h_pad).astype(jnp.bfloat16)

    resident = (n_pad * h_pad * 2) <= _PROJ_RESIDENT_BYTES

    # GCN layer 1 (+ fused layer-2 projection):
    #   proj2 = dinv * ( relu(A_hat @ proj1 * dinv_row + b1) @ W2 )
    proj2 = _gcn_aggregate(adj_i8, proj1, dinv_col, b1_p, w2_p,
                           tile_m=tile_m, tile_k=tile_k, resident=resident,
                           relu=True, fuse_next=True, out_dtype=jnp.bfloat16)

    # GCN layer 2:  h2 = A_hat-aggregate(proj2) * dinv_row + b2   (bf16 out)
    h2 = _gcn_aggregate(adj_i8, proj2, dinv_col, b2_p, w2_p,
                        tile_m=tile_m, tile_k=tile_k, resident=resident,
                        relu=False, fuse_next=False, out_dtype=jnp.bfloat16)

    # ---- mean-pool matrix: bf16 binary one-hot; 1/count applied in-kernel.
    batch_pad = jnp.concatenate(
        [batch.astype(jnp.int32), jnp.full((n_pad - n,), -1, jnp.int32)])
    onehot = (batch_pad[None, :] ==
              jnp.arange(g_pad, dtype=jnp.int32)[:, None])
    counts = jnp.maximum(
        jnp.sum(onehot.astype(jnp.float32), axis=1, keepdims=True), 1.0)
    pool = onehot.astype(jnp.bfloat16)                      # (g_pad, n_pad) 0/1
    inv_counts = 1.0 / counts                               # (g_pad, 1) f32

    # ---- MLP head parameters (f32, lane-padded to 128).
    wf1_p = _pad2(wf1, h_pad, LANE); bf1_p = _pad2(bf1, 1, LANE)
    wf2_p = _pad2(wf2, LANE, LANE);  bf2_p = _pad2(bf2, 1, LANE)
    wf3_p = _pad2(wf3, LANE, LANE);  bf3_p = _pad2(bf3, 1, LANE)

    out_pad = _pool_head(pool, inv_counts, h2,
                         (wf1_p, bf1_p, wf2_p, bf2_p, wf3_p, bf3_p),
                         tile_k, min_a=min_a, max_a=max_a)
    return out_pad[:num_graphs, :3]


def init_params(key, input_dim, hidden_dim):
    """Deterministic (uniform) parameter init; weights stored as [in, out],
    biases stored as [1, out]."""
    ks = jax.random.split(key, 10)

    def u(k, shape, fan_in):
        bound = 1.0 / jnp.sqrt(jnp.float32(fan_in))
        return jax.random.uniform(k, shape, jnp.float32, -bound, bound)

    w1 = u(ks[0], (input_dim, hidden_dim), input_dim)
    b1 = u(ks[1], (1, hidden_dim), input_dim)
    w2 = u(ks[2], (hidden_dim, hidden_dim), hidden_dim)
    b2 = u(ks[3], (1, hidden_dim), hidden_dim)
    wf1 = u(ks[4], (hidden_dim, 64), hidden_dim)
    bf1 = u(ks[5], (1, 64), hidden_dim)
    wf2 = u(ks[6], (64, 32), 64)
    bf2 = u(ks[7], (1, 32), 64)
    wf3 = u(ks[8], (32, 3), 32)
    bf3 = u(ks[9], (1, 3), 32)
    return (w1, b1, w2, b2, wf1, bf1, wf2, bf2, wf3, bf3)


if __name__ == "__main__":
    key = jax.random.PRNGKey(0)
    k_x, k_p = jax.random.split(key)

    NUM_GRAPHS = 2
    NODES_PER_GRAPH = 72           # N = 144 -> padded to 256 -> 1x1 tile grid
    N = NUM_GRAPHS * NODES_PER_GRAPH
    INPUT_DIM = 8
    HIDDEN_DIM = 32

    # Node features.
    x = jax.random.normal(k_x, (N, INPUT_DIM), jnp.float32)

    # Two ring graphs (undirected: both directions listed).
    edges = []
    for g in range(NUM_GRAPHS):
        base = g * NODES_PER_GRAPH
        for i in range(NODES_PER_GRAPH):
            a = base + i
            b = base + (i + 1) % NODES_PER_GRAPH
            edges.append((a, b))
            edges.append((b, a))
    edge_index = jnp.array(edges, dtype=jnp.int32).T  # [2, E]

    # Graph assignment per node.
    batch = jnp.repeat(jnp.arange(NUM_GRAPHS, dtype=jnp.int32), NODES_PER_GRAPH)

    params = init_params(k_p, INPUT_DIM, HIDDEN_DIM)

    out = mem_gnn_forward(x, edge_index, batch, params, NUM_GRAPHS)
    out = jax.block_until_ready(out)
    assert out.shape == (NUM_GRAPHS, 3)
    assert bool(jnp.all(jnp.isfinite(out)))
    # column 0 must land in [min_a, max_a]
    assert bool(jnp.all(out[:, 0] >= MIN_A)) and bool(jnp.all(out[:, 0] <= MAX_A))
    print("KERNEL_OK")
</pallas_src>

<mosaic_0001>
module attributes {stable_mosaic.version = 11 : i64} {
  func.func @_gcn_agg_kernel(%arg0: i32, %arg1: i32, %arg2: memref<256x256xi8, #tpu.memory_space<vmem>>, %arg3: memref<256x128xbf16, #tpu.memory_space<vmem>>, %arg4: memref<256x1xf32, #tpu.memory_space<vmem>>, %arg5: memref<1x128xf32, #tpu.memory_space<vmem>>, %arg6: memref<128x128xbf16, #tpu.memory_space<vmem>>, %arg7: memref<256x128xbf16, #tpu.memory_space<vmem>>, %arg8: memref<256x128xf32, #tpu.memory_space<vmem>>) attributes {dimension_semantics = [#tpu.dimension_semantics<parallel>, #tpu.dimension_semantics<arbitrary>], iteration_bounds = array<i64: 1, 1>, scalar_prefetch = 0 : i64, scratch_operands = 1 : i64, tpu.core_type = #tpu.core_type<tc>, window_params = [{transform_indices = @transform_0, window_bounds = array<i64: 256, 256>}, {pipeline_mode = #tpu.pipeline_mode<synchronous>, transform_indices = @transform_1, window_bounds = array<i64: 256, 128>}, {transform_indices = @transform_2, window_bounds = array<i64: 256, 1>}, {pipeline_mode = #tpu.pipeline_mode<synchronous>, transform_indices = @transform_3, window_bounds = array<i64: 1, 128>}, {pipeline_mode = #tpu.pipeline_mode<synchronous>, transform_indices = @transform_4, window_bounds = array<i64: 128, 128>}, {transform_indices = @transform_5, window_bounds = array<i64: 256, 128>}]} {
    %c0_i32 = arith.constant 0 : i32
    %0 = arith.cmpi eq, %arg1, %c0_i32 : i32
    %1 = arith.extui %0 : i1 to i32
    %c0_i32_0 = arith.constant 0 : i32
    %2 = arith.cmpi ne, %1, %c0_i32_0 : i32
    scf.if %2 {
      %cst_9 = arith.constant 0.000000e+00 : f32
      %16 = vector.broadcast %cst_9 : f32 to vector<256x128xf32>
      %c0_10 = arith.constant 0 : index
      %c0_11 = arith.constant 0 : index
      %17 = vector.load %arg8[%c0_10, %c0_11] : memref<256x128xf32, #tpu.memory_space<vmem>>, vector<256x128xf32>
      tpu.vector_store %arg8[%c0_10, %c0_11], %16 {strides = array<i32>} : memref<256x128xf32, #tpu.memory_space<vmem>>, vector<256x128xf32>,
    } else {
    }
    %c256_i32 = arith.constant 256 : i32
    %3 = arith.muli %arg1, %c256_i32 : i32
    %4 = tpu.assume_multiple %3, 256 : i32
    %5 = arith.index_cast %4 : i32 to index
    %c0 = arith.constant 0 : index
    %6 = vector.load %arg3[%5, %c0] : memref<256x128xbf16, #tpu.memory_space<vmem>>, vector<256x128xbf16>
    %c0_1 = arith.constant 0 : index
    %c0_2 = arith.constant 0 : index
    %7 = vector.load %arg2[%c0_1, %c0_2] : memref<256x256xi8, #tpu.memory_space<vmem>>, vector<256x256xi8>
    %8 = arith.sitofp %7 : vector<256x256xi8> to vector<256x256xbf16>
    %c0_3 = arith.constant 0 : index
    %c0_4 = arith.constant 0 : index
    %9 = vector.load %arg8[%c0_3, %c0_4] : memref<256x128xf32, #tpu.memory_space<vmem>>, vector<256x128xf32>
    %cst = arith.constant dense<0.000000e+00> : vector<256x128xf32>
    %10 = tpu.matmul %8, %6, %cst {dimension_numbers = #tpu.dot_dimension_numbers<[1], [0], [0], [1], [0, 0, 1, 1], [], []>} : vector<256x256xbf16>, vector<256x128xbf16>, vector<256x128xf32> -> vector<256x128xf32>
    %11 = arith.addf %9, %10 : vector<256x128xf32>
    %c0_5 = arith.constant 0 : index
    %c0_6 = arith.constant 0 : index
    %12 = vector.load %arg8[%c0_5, %c0_6] : memref<256x128xf32, #tpu.memory_space<vmem>>, vector<256x128xf32>
    tpu.vector_store %arg8[%c0_5, %c0_6], %11 {strides = array<i32>} : memref<256x128xf32, #tpu.memory_space<vmem>>, vector<256x128xf32>,
    %c0_i32_7 = arith.constant 0 : i32
    %13 = arith.cmpi eq, %arg1, %c0_i32_7 : i32
    %14 = arith.extui %13 : i1 to i32
    %c0_i32_8 = arith.constant 0 : i32
    %15 = arith.cmpi ne, %14, %c0_i32_8 : i32
    scf.if %15 {
      %c0_9 = arith.constant 0 : index
      %c0_10 = arith.constant 0 : index
      %16 = vector.load %arg4[%c0_9, %c0_10] : memref<256x1xf32, #tpu.memory_space<vmem>>, vector<256x1xf32>
      %c0_11 = arith.constant 0 : index
      %c0_12 = arith.constant 0 : index
      %17 = vector.load %arg8[%c0_11, %c0_12] : memref<256x128xf32, #tpu.memory_space<vmem>>, vector<256x128xf32>
      %18 = vector.broadcast %16 : vector<256x1xf32> to vector<256x128xf32>
      %19 = arith.mulf %17, %18 : vector<256x128xf32>
      %c0_13 = arith.constant 0 : index
      %c0_14 = arith.constant 0 : index
      %20 = vector.load %arg5[%c0_13, %c0_14] : memref<1x128xf32, #tpu.memory_space<vmem>>, vector<1x128xf32>
      %21 = vector.broadcast %20 : vector<1x128xf32> to vector<256x128xf32>
      %22 = arith.addf %19, %21 : vector<256x128xf32>
      %cst_15 = arith.constant 0.000000e+00 : f32
      %23 = vector.broadcast %cst_15 : f32 to vector<256x128xf32>
      %24 = arith.maximumf %22, %23 : vector<256x128xf32>
      %25 = arith.truncf %24 : vector<256x128xf32> to vector<256x128xbf16>
      %c0_16 = arith.constant 0 : index
      %c0_17 = arith.constant 0 : index
      %26 = vector.load %arg6[%c0_16, %c0_17] : memref<128x128xbf16, #tpu.memory_space<vmem>>, vector<128x128xbf16>
      %cst_18 = arith.constant dense<0.000000e+00> : vector<256x128xf32>
      %27 = tpu.matmul %25, %26, %cst_18 {dimension_numbers = #tpu.dot_dimension_numbers<[1], [0], [0], [1], [0, 0, 1, 1], [], []>} : vector<256x128xbf16>, vector<128x128xbf16>, vector<256x128xf32> -> vector<256x128xf32>
      %28 = vector.broadcast %16 : vector<256x1xf32> to vector<256x128xf32>
      %29 = arith.mulf %27, %28 : vector<256x128xf32>
      %30 = arith.truncf %29 : vector<256x128xf32> to vector<256x128xbf16>
      %c0_19 = arith.constant 0 : index
      %c0_20 = arith.constant 0 : index
      %31 = vector.load %arg7[%c0_19, %c0_20] : memref<256x128xbf16, #tpu.memory_space<vmem>>, vector<256x128xbf16>
      tpu.vector_store %arg7[%c0_19, %c0_20], %30 {strides = array<i32>} : memref<256x128xbf16, #tpu.memory_space<vmem>>, vector<256x128xbf16>,
    } else {
    }
    return
  }
  func.func @transform_0(%arg0: i32, %arg1: i32) -> (i32, i32) {
    %c0_i32 = arith.constant 0 : i32
    return %arg0, %arg1 : i32, i32
  }
  func.func @transform_1(%arg0: i32, %arg1: i32) -> (i32, i32) {
    %c0_i32 = arith.constant 0 : i32
    %c0_i32_0 = arith.constant 0 : i32
    %c0_i32_1 = arith.constant 0 : i32
    return %c0_i32, %c0_i32_0 : i32, i32
  }
  func.func @transform_2(%arg0: i32, %arg1: i32) -> (i32, i32) {
    %c0_i32 = arith.constant 0 : i32
    %c0_i32_0 = arith.constant 0 : i32
    return %arg0, %c0_i32 : i32, i32
  }
  func.func @transform_3(%arg0: i32, %arg1: i32) -> (i32, i32) {
    %c0_i32 = arith.constant 0 : i32
    %c0_i32_0 = arith.constant 0 : i32
    %c0_i32_1 = arith.constant 0 : i32
    return %c0_i32, %c0_i32_0 : i32, i32
  }
  func.func @transform_4(%arg0: i32, %arg1: i32) -> (i32, i32) {
    %c0_i32 = arith.constant 0 : i32
    %c0_i32_0 = arith.constant 0 : i32
    %c0_i32_1 = arith.constant 0 : i32
    return %c0_i32, %c0_i32_0 : i32, i32
  }
  func.func @transform_5(%arg0: i32, %arg1: i32) -> (i32, i32) {
    %c0_i32 = arith.constant 0 : i32
    %c0_i32_0 = arith.constant 0 : i32
    return %arg0, %c0_i32 : i32, i32
  }
}

</mosaic_0001>

<llo_original>
// kernel: tpu_custom_call.1
$region0: #{tpu_custom_call.1}
  #allocation0 [shape = 'u32[]', space=smem, size = 0x4, offset = 0x4, fixed_abs, tag = 'smem constant byte address 0x4 - core index']
  #allocation1 [shape = 'u32[144,128]{1,0:T(1,128)}', space=vmem, size = 0x12000, scoped, tag = 'internal scratch']
  #allocation2 [shape = 'f32[256,128]{1,0:T(8,128)}', space=vmem, size = 0x20000, scoped, tag = 'scratch operand']
  %s0 = inlined_call_operand.vmem [shape: s8[256,256], index: 0, kind: input, shape index: {}]
  %s1 = inlined_call_operand.vmem [shape: bf16[256,128], index: 1, kind: input, shape index: {}]
  %s2 = inlined_call_operand.vmem [shape: f32[256,1], index: 2, kind: input, shape index: {}]
  %s3 = inlined_call_operand.vmem [shape: f32[1,128], index: 3, kind: input, shape index: {}]
  %s4 = inlined_call_operand.hbm [shape: bf16[128,128], index: 4, kind: input, shape index: {}]
  %s5 = inlined_call_operand.hbm [shape: bf16[256,128], index: 5, kind: output, shape index: {}]
  %s6 = sld [smem:[#allocation0]]
  $region42: #{tpu_custom_call.1} parent=0
    _
  %s8 = ssub.s32 1, %s6
  %s9 = scalar_select 0, %s8, %s6
  $region1: #{tpu_custom_call.1} parent=0
    #allocation3 [shape = 'u8[32768]{0}', space=vmem, size = 0x8000, scoped, tag = 'input window, operand 4, single buffered']
    #allocation4 [shape = 's32[1]{0}', space=sflag, size = 0x4, scoped, tag = 'scoped memory for tpu_custom_call.1']
    #allocation5 [shape = 's32[1]{0}', space=sflag, size = 0x4, scoped, tag = 'scoped memory for tpu_custom_call.1']
    #allocation6 [shape = 'u8[65536]{0}', space=vmem, size = 0x10000, scoped, tag = 'output window, operand 0, single buffered']
    %10 = vsyncpa [#allocation4], 0
    %11 = vsyncpa [#allocation5], 0
    // Predicated region
    $region2: #{tpu_custom_call.1} parent=1 // pred_check
      _
    $region3: #{tpu_custom_call.1} parent=1 // pred_check_branch
      %13 = sbr.rel (0) target = $region5
    $region4: #{tpu_custom_call.1} parent=1 // pred_region
      _
    $region5: #{tpu_custom_call.1} parent=1 // pred_fallthru
      _
    // Predicated region
    $region6: #{tpu_custom_call.1} parent=1 // pred_check
      _
    $region7: #{tpu_custom_call.1} parent=1 // pred_check_branch
      %15 = sbr.rel (0) target = $region9
    $region8: #{tpu_custom_call.1} parent=1 // pred_region
      _
    $region9: #{tpu_custom_call.1} parent=1 // pred_fallthru
      _
    // Predicated region
    $region10: #{tpu_custom_call.1} parent=1 // pred_check
      _
    $region11: #{tpu_custom_call.1} parent=1 // pred_check_branch
      %17 = sbr.rel (0) target = $region13
    $region12: #{tpu_custom_call.1} parent=1 // pred_region
      _
    $region13: #{tpu_custom_call.1} parent=1 // pred_fallthru
      _
    // Predicated region
    $region14: #{tpu_custom_call.1} parent=1 // pred_check
      _
    $region15: #{tpu_custom_call.1} parent=1 // pred_check_branch
      %19 = sbr.rel (0) target = $region17
    $region16: #{tpu_custom_call.1} parent=1 // pred_region
      _
    $region17: #{tpu_custom_call.1} parent=1 // pred_fallthru
      _
    // Predicated region
    $region18: #{tpu_custom_call.1} parent=1 // pred_check
      _
    $region19: #{tpu_custom_call.1} parent=1 // pred_check_branch
      %21 = sbr.rel (0) target = $region21
    $region20: #{tpu_custom_call.1} parent=1 // pred_region
      %s23 = ssub.s32 1024, 1024
      %24 = vsyncadd [#allocation4], %s23
      %s25 = sshll.u32 [#allocation3], 4
      %s26 = int_to_ptr.vmem [resolvable:$true] %s25
      %31 = dma.hbm_to_vmem [thread:$0]  %s4, 1024, %s26, [#allocation4], 64, 64, 4
    $region21: #{tpu_custom_call.1} parent=1 // pred_fallthru
      _
    // Predicated region
    $region22: #{tpu_custom_call.1} parent=1 // pred_check
      _
    $region23: #{tpu_custom_call.1} parent=1 // pred_check_branch
      %33 = sbr.rel (0) target = $region25
    $region24: #{tpu_custom_call.1} parent=1 // pred_region
      %34 = dma.done [#allocation4], 1024
    $region25: #{tpu_custom_call.1} parent=1 // pred_fallthru
      _
    %p36 = scmp.eq.s32.totalorder 0, 0
    // Predicated region
    $region26: #{tpu_custom_call.1} parent=1 // pred_check
      %p37 = pneg %p36
    $region27: #{tpu_custom_call.1} parent=1 // pred_check_branch
      %39 = sbr.rel (%p37) target = $region29
    $region28: #{tpu_custom_call.1} parent=1 // pred_region
      %40 = vst [vmem:[#allocation2] sm:$0xff] 0.0
      %41 = vst [vmem:[#allocation2 + $0x8] sm:$0xff] 0.0
      %42 = vst [vmem:[#allocation2 + $0x10] sm:$0xff] 0.0
      %43 = vst [vmem:[#allocation2 + $0x18] sm:$0xff] 0.0
      %44 = vst [vmem:[#allocation2 + $0x20] sm:$0xff] 0.0
      %45 = vst [vmem:[#allocation2 + $0x28] sm:$0xff] 0.0
      %46 = vst [vmem:[#allocation2 + $0x30] sm:$0xff] 0.0
      %47 = vst [vmem:[#allocation2 + $0x38] sm:$0xff] 0.0
      %48 = vst [vmem:[#allocation2 + $0x40] sm:$0xff] 0.0
      %49 = vst [vmem:[#allocation2 + $0x48] sm:$0xff] 0.0
      %50 = vst [vmem:[#allocation2 + $0x50] sm:$0xff] 0.0
      %51 = vst [vmem:[#allocation2 + $0x58] sm:$0xff] 0.0
      %52 = vst [vmem:[#allocation2 + $0x60] sm:$0xff] 0.0
      %53 = vst [vmem:[#allocation2 + $0x68] sm:$0xff] 0.0
      %54 = vst [vmem:[#allocation2 + $0x70] sm:$0xff] 0.0
      %55 = vst [vmem:[#allocation2 + $0x78] sm:$0xff] 0.0
      %56 = vst [vmem:[#allocation2 + $0x80] sm:$0xff] 0.0
      %57 = vst [vmem:[#allocation2 + $0x88] sm:$0xff] 0.0
      %58 = vst [vmem:[#allocation2 + $0x90] sm:$0xff] 0.0
      %59 = vst [vmem:[#allocation2 + $0x98] sm:$0xff] 0.0
      %60 = vst [vmem:[#allocation2 + $0xa0] sm:$0xff] 0.0
      %61 = vst [vmem:[#allocation2 + $0xa8] sm:$0xff] 0.0
      %62 = vst [vmem:[#allocation2 + $0xb0] sm:$0xff] 0.0
      %63 = vst [vmem:[#allocation2 + $0xb8] sm:$0xff] 0.0
      %64 = vst [vmem:[#allocation2 + $0xc0] sm:$0xff] 0.0
      %65 = vst [vmem:[#allocation2 + $0xc8] sm:$0xff] 0.0
      %66 = vst [vmem:[#allocation2 + $0xd0] sm:$0xff] 0.0
      %67 = vst [vmem:[#allocation2 + $0xd8] sm:$0xff] 0.0
      %68 = vst [vmem:[#allocation2 + $0xe0] sm:$0xff] 0.0
      %69 = vst [vmem:[#allocation2 + $0xe8] sm:$0xff] 0.0
      %70 = vst [vmem:[#allocation2 + $0xf0] sm:$0xff] 0.0
      %71 = vst [vmem:[#allocation2 + $0xf8] sm:$0xff] 0.0
    $region29: #{tpu_custom_call.1} parent=1 // pred_fallthru
      _
    %s72 = smul.u32 0, 256
    %s73 = sshra.s32 %s72, 3
    %s74 = sand.u32 %s72, 7
    %s75 = smul.addr %s73, 4
    %s76 = scalar_lea.vmem %s1, %s75
    %v77 = vld [vmem:[%s76] sm:$0xf]
    %v78 = vld [vmem:[%s76 + $0x4] sm:$0xf]
    %v79 = vld [vmem:[%s76 + $0x8] sm:$0xf]
    %v80 = vld [vmem:[%s76 + $0xc] sm:$0xf]
    %v81 = vld [vmem:[%s76 + $0x10] sm:$0xf]
    %v82 = vld [vmem:[%s76 + $0x14] sm:$0xf]
    %v83 = vld [vmem:[%s76 + $0x18] sm:$0xf]
    %v84 = vld [vmem:[%s76 + $0x1c] sm:$0xf]
    %v85 = vld [vmem:[%s76 + $0x20] sm:$0xf]
    %v86 = vld [vmem:[%s76 + $0x24] sm:$0xf]
    %v87 = vld [vmem:[%s76 + $0x28] sm:$0xf]
    %v88 = vld [vmem:[%s76 + $0x2c] sm:$0xf]
    %v89 = vld [vmem:[%s76 + $0x30] sm:$0xf]
    %v90 = vld [vmem:[%s76 + $0x34] sm:$0xf]
    %v91 = vld [vmem:[%s76 + $0x38] sm:$0xf]
    %v92 = vld [vmem:[%s76 + $0x3c] sm:$0xf]
    %v93 = vld [vmem:[%s76 + $0x40] sm:$0xf]
    %v94 = vld [vmem:[%s76 + $0x44] sm:$0xf]
    %v95 = vld [vmem:[%s76 + $0x48] sm:$0xf]
    %v96 = vld [vmem:[%s76 + $0x4c] sm:$0xf]
    %v97 = vld [vmem:[%s76 + $0x50] sm:$0xf]
    %v98 = vld [vmem:[%s76 + $0x54] sm:$0xf]
    %v99 = vld [vmem:[%s76 + $0x58] sm:$0xf]
    %v100 = vld [vmem:[%s76 + $0x5c] sm:$0xf]
    %v101 = vld [vmem:[%s76 + $0x60] sm:$0xf]
    %v102 = vld [vmem:[%s76 + $0x64] sm:$0xf]
    %v103 = vld [vmem:[%s76 + $0x68] sm:$0xf]
    %v104 = vld [vmem:[%s76 + $0x6c] sm:$0xf]
    %v105 = vld [vmem:[%s76 + $0x70] sm:$0xf]
    %v106 = vld [vmem:[%s76 + $0x74] sm:$0xf]
    %v107 = vld [vmem:[%s76 + $0x78] sm:$0xf]
    %v108 = vld [vmem:[%s76 + $0x7c] sm:$0xf]
    %v109 = vld [vmem:[%s0] sm:$0xff]
    %v110 = vld [vmem:[%s0 + $0x8] sm:$0xff]
    %v111 = vld [vmem:[%s0 + $0x10] sm:$0xff]
    %v112 = vld [vmem:[%s0 + $0x18] sm:$0xff]
    %v113 = vld [vmem:[%s0 + $0x20] sm:$0xff]
    %v114 = vld [vmem:[%s0 + $0x28] sm:$0xff]
    %v115 = vld [vmem:[%s0 + $0x30] sm:$0xff]
    %v116 = vld [vmem:[%s0 + $0x38] sm:$0xff]
    %v117 = vld [vmem:[%s0 + $0x40] sm:$0xff]
    %v118 = vld [vmem:[%s0 + $0x48] sm:$0xff]
    %v119 = vld [vmem:[%s0 + $0x50] sm:$0xff]
    %v120 = vld [vmem:[%s0 + $0x58] sm:$0xff]
    %v121 = vld [vmem:[%s0 + $0x60] sm:$0xff]
    %v122 = vld [vmem:[%s0 + $0x68] sm:$0xff]
    %v123 = vld [vmem:[%s0 + $0x70] sm:$0xff]
    %v124 = vld [vmem:[%s0 + $0x78] sm:$0xff]
    %v125 = vunpack.c.l.s8.bf16 %v109
    %v126 = vunpack.c.l.s8.bf16 %v110
    %v127 = vunpack.c.h.s8.bf16 %v109
    %v128 = vunpack.c.h.s8.bf16 %v110
    %v129 = vunpack.c.l.s8.bf16 %v111
    %v130 = vunpack.c.l.s8.bf16 %v112
    %v131 = vunpack.c.h.s8.bf16 %v111
    %v132 = vunpack.c.h.s8.bf16 %v112
    %v133 = vunpack.c.l.s8.bf16 %v113
    %v134 = vunpack.c.l.s8.bf16 %v114
    %v135 = vunpack.c.h.s8.bf16 %v113
    %v136 = vunpack.c.h.s8.bf16 %v114
    %v137 = vunpack.c.l.s8.bf16 %v115
    %v138 = vunpack.c.l.s8.bf16 %v116
    %v139 = vunpack.c.h.s8.bf16 %v115
    %v140 = vunpack.c.h.s8.bf16 %v116
    %v141 = vunpack.c.l.s8.bf16 %v117
    %v142 = vunpack.c.l.s8.bf16 %v118
    %v143 = vunpack.c.h.s8.bf16 %v117
    %v144 = vunpack.c.h.s8.bf16 %v118
    %v145 = vunpack.c.l.s8.bf16 %v119
    %v146 = vunpack.c.l.s8.bf16 %v120
    %v147 = vunpack.c.h.s8.bf16 %v119
    %v148 = vunpack.c.h.s8.bf16 %v120
    %v149 = vunpack.c.l.s8.bf16 %v121
    %v150 = vunpack.c.l.s8.bf16 %v122
    %v151 = vunpack.c.h.s8.bf16 %v121
    %v152 = vunpack.c.h.s8.bf16 %v122
    %v153 = vunpack.c.l.s8.bf16 %v123
    %v154 = vunpack.c.l.s8.bf16 %v124
    %v155 = vunpack.c.h.s8.bf16 %v123
    %v156 = vunpack.c.h.s8.bf16 %v124
    %v157 = vld [vmem:[#allocation2] sm:$0xff]
    %v158 = vld [vmem:[#allocation2 + $0x8] sm:$0xff]
    %v159 = vld [vmem:[#allocation2 + $0x10] sm:$0xff]
    %v160 = vld [vmem:[#allocation2 + $0x18] sm:$0xff]
    %v161 = vld [vmem:[#allocation2 + $0x20] sm:$0xff]
    %v162 = vld [vmem:[#allocation2 + $0x28] sm:$0xff]
    %v163 = vld [vmem:[#allocation2 + $0x30] sm:$0xff]
    %v164 = vld [vmem:[#allocation2 + $0x38] sm:$0xff]
    %v165 = vld [vmem:[#allocation2 + $0x40] sm:$0xff]
    %v166 = vld [vmem:[#allocation2 + $0x48] sm:$0xff]
    %v167 = vld [vmem:[#allocation2 + $0x50] sm:$0xff]
    %v168 = vld [vmem:[#allocation2 + $0x58] sm:$0xff]
    %v169 = vld [vmem:[#allocation2 + $0x60] sm:$0xff]
    %v170 = vld [vmem:[#allocation2 + $0x68] sm:$0xff]
    %v171 = vld [vmem:[#allocation2 + $0x70] sm:$0xff]
    %v172 = vld [vmem:[#allocation2 + $0x78] sm:$0xff]
    %v173 = vld [vmem:[#allocation2 + $0x80] sm:$0xff]
    %v174 = vld [vmem:[#allocation2 + $0x88] sm:$0xff]
    %v175 = vld [vmem:[#allocation2 + $0x90] sm:$0xff]
    %v176 = vld [vmem:[#allocation2 + $0x98] sm:$0xff]
    %v177 = vld [vmem:[#allocation2 + $0xa0] sm:$0xff]
    %v178 = vld [vmem:[#allocation2 + $0xa8] sm:$0xff]
    %v179 = vld [vmem:[#allocation2 + $0xb0] sm:$0xff]
    %v180 = vld [vmem:[#allocation2 + $0xb8] sm:$0xff]
    %v181 = vld [vmem:[#allocation2 + $0xc0] sm:$0xff]
    %v182 = vld [vmem:[#allocation2 + $0xc8] sm:$0xff]
    %v183 = vld [vmem:[#allocation2 + $0xd0] sm:$0xff]
    %v184 = vld [vmem:[#allocation2 + $0xd8] sm:$0xff]
    %v185 = vld [vmem:[#allocation2 + $0xe0] sm:$0xff]
    %v186 = vld [vmem:[#allocation2 + $0xe8] sm:$0xff]
    %v187 = vld [vmem:[#allocation2 + $0xf0] sm:$0xff]
    %v188 = vld [vmem:[#allocation2 + $0xf8] sm:$0xff]
    %v221 = vunpack.c.l.b16 %v77
    %v222 = vunpack.c.l.b16 %v78
    %v223 = vunpack.c.l.b16 %v79
    %v224 = vunpack.c.l.b16 %v80
    %v225 = vunpack.c.l.b16 %v81
    %v226 = vunpack.c.l.b16 %v82
    %v227 = vunpack.c.l.b16 %v83
    %v228 = vunpack.c.l.b16 %v84
    %v229 = vunpack.c.l.b16 %v85
    %v230 = vunpack.c.l.b16 %v86
    %v231 = vunpack.c.l.b16 %v87
    %v232 = vunpack.c.l.b16 %v88
    %v233 = vunpack.c.l.b16 %v89
    %v234 = vunpack.c.l.b16 %v90
    %v235 = vunpack.c.l.b16 %v91
    %v236 = vunpack.c.l.b16 %v92
    %v237 = vunpack.c.l.b16 %v93
    %v238 = vunpack.c.l.b16 %v94
    %v239 = vunpack.c.l.b16 %v95
    %v240 = vunpack.c.l.b16 %v96
    %v241 = vunpack.c.l.b16 %v97
    %v242 = vunpack.c.l.b16 %v98
    %v243 = vunpack.c.l.b16 %v99
    %v244 = vunpack.c.l.b16 %v100
    %v245 = vunpack.c.l.b16 %v101
    %v246 = vunpack.c.l.b16 %v102
    %v247 = vunpack.c.l.b16 %v103
    %v248 = vunpack.c.l.b16 %v104
    %v249 = vunpack.c.l.b16 %v105
    %v250 = vunpack.c.l.b16 %v106
    %v251 = vunpack.c.l.b16 %v107
    %v252 = vunpack.c.l.b16 %v108
    %v253 = vpack.c.b16 %v222, %v221
    %v254 = vpack.c.b16 %v224, %v223
    %v255 = vpack.c.b16 %v226, %v225
    %v256 = vpack.c.b16 %v228, %v227
    %v257 = vpack.c.b16 %v230, %v229
    %v258 = vpack.c.b16 %v232, %v231
    %v259 = vpack.c.b16 %v234, %v233
    %v260 = vpack.c.b16 %v236, %v235
    %v261 = vpack.c.b16 %v238, %v237
    %v262 = vpack.c.b16 %v240, %v239
    %v263 = vpack.c.b16 %v242, %v241
    %v264 = vpack.c.b16 %v244, %v243
    %v265 = vpack.c.b16 %v246, %v245
    %v266 = vpack.c.b16 %v248, %v247
    %v267 = vpack.c.b16 %v250, %v249
    %v268 = vpack.c.b16 %v252, %v251
    %285 = vmatprep.subr.bf16.mxu0 0
    %286 = vmatpush1.bf16.msra.mxu0 %v253
    %287 = vmatprep.subr.bf16.mxu0 0
    %288 = vmatpush1.bf16.msra.mxu0 %v254
    %289 = vmatprep.subr.bf16.mxu0 0
    %290 = vmatpush1.bf16.msra.mxu0 %v255
    %291 = vmatprep.subr.bf16.mxu0 0
    %292 = vmatpush1.bf16.msra.mxu0 %v256
    %293 = vmatprep.subr.bf16.mxu0 0
    %294 = vmatpush1.bf16.msra.mxu0 %v257
    %295 = vmatprep.subr.bf16.mxu0 0
    %296 = vmatpush1.bf16.msra.mxu0 %v258
    %297 = vmatprep.subr.bf16.mxu0 0
    %298 = vmatpush1.bf16.msra.mxu0 %v259
    %299 = vmatprep.subr.bf16.mxu0 0
    %300 = vmatpush1.bf16.msra.mxu0 %v260
    %301 = vmatprep.subr.bf16.mxu0 0
    %302 = vmatpush1.bf16.msra.mxu0 %v261
    %303 = vmatprep.subr.bf16.mxu0 0
    %304 = vmatpush1.bf16.msra.mxu0 %v262
    %305 = vmatprep.subr.bf16.mxu0 0
    %306 = vmatpush1.bf16.msra.mxu0 %v263
    %307 = vmatprep.subr.bf16.mxu0 0
    %308 = vmatpush1.bf16.msra.mxu0 %v264
    %309 = vmatprep.subr.bf16.mxu0 0
    %310 = vmatpush1.bf16.msra.mxu0 %v265
    %311 = vmatprep.subr.bf16.mxu0 0
    %312 = vmatpush1.bf16.msra.mxu0 %v266
    %313 = vmatprep.subr.bf16.mxu0 0
    %314 = vmatpush1.bf16.msra.mxu0 %v267
    %315 = vmatprep.subr.bf16.mxu0 0
    %316 = vmatpush1.bf16.msra.mxu0 %v268
    %317 = vmatprep.mubr.bf16.mxu0 %v126
    %318 = vmatmul.mubr.bf16.gmra.mrb[0].mxu0 %v125
    %v319 = vpop.f32.mrb[0].mxu0
    %v320 = vadd.f32 0.0, %v319
    %v321 = vpop.f32.mrb[0].mxu0
    %v322 = vpop.f32.mrb[0].mxu0
    %v323 = vadd.f32 0.0, %v322
    %v324 = vpop.f32.mrb[0].mxu0
    %325 = vmatprep.mubr.bf16.mxu0 %v128
    %326 = vmatmul.mubr.bf16.gmra.mrb[0].mxu0 %v127
    %v327 = vpop.f32.mrb[0].mxu0
    %v328 = vadd.f32 0.0, %v327
    %v329 = vpop.f32.mrb[0].mxu0
    %v330 = vpop.f32.mrb[0].mxu0
    %v331 = vadd.f32 0.0, %v330
    %v332 = vpop.f32.mrb[0].mxu0
    %333 = vmatprep.mubr.bf16.mxu0 %v130
    %334 = vmatmul.mubr.bf16.gmra.mrb[0].mxu0 %v129
    %v335 = vpop.f32.mrb[0].mxu0
    %v336 = vadd.f32 0.0, %v335
    %v337 = vpop.f32.mrb[0].mxu0
    %v338 = vpop.f32.mrb[0].mxu0
    %v339 = vadd.f32 0.0, %v338
    %v340 = vpop.f32.mrb[0].mxu0
    %341 = vmatprep.mubr.bf16.mxu0 %v132
    %342 = vmatmul.mubr.bf16.gmra.mrb[0].mxu0 %v131
    %v343 = vpop.f32.mrb[0].mxu0
    %v344 = vadd.f32 0.0, %v343
    %v345 = vpop.f32.mrb[0].mxu0
    %v346 = vpop.f32.mrb[0].mxu0
    %v347 = vadd.f32 0.0, %v346
    %v348 = vpop.f32.mrb[0].mxu0
    %349 = vmatprep.mubr.bf16.mxu0 %v134
    %350 = vmatmul.mubr.bf16.gmra.mrb[0].mxu0 %v133
    %v351 = vpop.f32.mrb[0].mxu0
    %v352 = vadd.f32 0.0, %v351
    %v353 = vpop.f32.mrb[0].mxu0
    %v354 = vpop.f32.mrb[0].mxu0
    %v355 = vadd.f32 0.0, %v354
    %v356 = vpop.f32.mrb[0].mxu0
    %357 = vmatprep.mubr.bf16.mxu0 %v136
    %358 = vmatmul.mubr.bf16.gmra.mrb[0].mxu0 %v135
    %v359 = vpop.f32.mrb[0].mxu0
    %v360 = vadd.f32 0.0, %v359
    %v361 = vpop.f32.mrb[0].mxu0
    %v362 = vpop.f32.mrb[0].mxu0
    %v363 = vadd.f32 0.0, %v362
    %v364 = vpop.f32.mrb[0].mxu0
    %365 = vmatprep.mubr.bf16.mxu0 %v138
    %366 = vmatmul.mubr.bf16.gmra.mrb[0].mxu0 %v137
    %v367 = vpop.f32.mrb[0].mxu0
    %v368 = vadd.f32 0.0, %v367
    %v369 = vpop.f32.mrb[0].mxu0
    %v370 = vpop.f32.mrb[0].mxu0
    %v371 = vadd.f32 0.0, %v370
    %v372 = vpop.f32.mrb[0].mxu0
    %373 = vmatprep.mubr.bf16.mxu0 %v140
    %374 = vmatmul.mubr.bf16.gmra.mrb[0].mxu0 %v139
    %v375 = vpop.f32.mrb[0].mxu0
    %v376 = vadd.f32 0.0, %v375
    %v377 = vpop.f32.mrb[0].mxu0
    %v378 = vpop.f32.mrb[0].mxu0
    %v379 = vadd.f32 0.0, %v378
    %v380 = vpop.f32.mrb[0].mxu0
    %381 = vmatprep.mubr.bf16.mxu0 %v142
    %382 = vmatmul.mubr.bf16.gmra.mrb[0].mxu0 %v141
    %v383 = vpop.f32.mrb[0].mxu0
    %v384 = vadd.f32 0.0, %v383
    %v385 = vpop.f32.mrb[0].mxu0
    %v386 = vpop.f32.mrb[0].mxu0
    %v387 = vadd.f32 0.0, %v386
    %v388 = vpop.f32.mrb[0].mxu0
    %389 = vmatprep.mubr.bf16.mxu0 %v144
    %390 = vmatmul.mubr.bf16.gmra.mrb[0].mxu0 %v143
    %v391 = vpop.f32.mrb[0].mxu0
    %v392 = vadd.f32 0.0, %v391
    %v393 = vpop.f32.mrb[0].mxu0
    %v394 = vpop.f32.mrb[0].mxu0
    %v395 = vadd.f32 0.0, %v394
    %v396 = vpop.f32.mrb[0].mxu0
    %397 = vmatprep.mubr.bf16.mxu0 %v146
    %398 = vmatmul.mubr.bf16.gmra.mrb[0].mxu0 %v145
    %v399 = vpop.f32.mrb[0].mxu0
    %v400 = vadd.f32 0.0, %v399
    %v401 = vpop.f32.mrb[0].mxu0
    %v402 = vpop.f32.mrb[0].mxu0
    %v403 = vadd.f32 0.0, %v402
    %v404 = vpop.f32.mrb[0].mxu0
    %405 = vmatprep.mubr.bf16.mxu0 %v148
    %406 = vmatmul.mubr.bf16.gmra.mrb[0].mxu0 %v147
    %v407 = vpop.f32.mrb[0].mxu0
    %v408 = vadd.f32 0.0, %v407
    %v409 = vpop.f32.mrb[0].mxu0
    %v410 = vpop.f32.mrb[0].mxu0
    %v411 = vadd.f32 0.0, %v410
    %v412 = vpop.f32.mrb[0].mxu0
    %413 = vmatprep.mubr.bf16.mxu0 %v150
    %414 = vmatmul.mubr.bf16.gmra.mrb[0].mxu0 %v149
    %v415 = vpop.f32.mrb[0].mxu0
    %v416 = vadd.f32 0.0, %v415
    %v417 = vpop.f32.mrb[0].mxu0
    %v418 = vpop.f32.mrb[0].mxu0
    %v419 = vadd.f32 0.0, %v418
    %v420 = vpop.f32.mrb[0].mxu0
    %421 = vmatprep.mubr.bf16.mxu0 %v152
    %422 = vmatmul.mubr.bf16.gmra.mrb[0].mxu0 %v151
    %v423 = vpop.f32.mrb[0].mxu0
    %v424 = vadd.f32 0.0, %v423
    %v425 = vpop.f32.mrb[0].mxu0
    %v426 = vpop.f32.mrb[0].mxu0
    %v427 = vadd.f32 0.0, %v426
    %v428 = vpop.f32.mrb[0].mxu0
    %429 = vmatprep.mubr.bf16.mxu0 %v154
    %430 = vmatmul.mubr.bf16.gmra.mrb[0].mxu0 %v153
    %v431 = vpop.f32.mrb[0].mxu0
    %v432 = vadd.f32 0.0, %v431
    %v433 = vpop.f32.mrb[0].mxu0
    %v434 = vpop.f32.mrb[0].mxu0
    %v435 = vadd.f32 0.0, %v434
    %v436 = vpop.f32.mrb[0].mxu0
    %437 = vmatprep.mubr.bf16.mxu0 %v156
    %438 = vmatmul.mubr.bf16.gmra.mrb[0].mxu0 %v155
    %v439 = vpop.f32.mrb[0].mxu0
    %v440 = vadd.f32 0.0, %v439
    %v441 = vpop.f32.mrb[0].mxu0
    %v442 = vpop.f32.mrb[0].mxu0
    %v443 = vadd.f32 0.0, %v442
    %v444 = vpop.f32.mrb[0].mxu0
    %445 = vdwg.mxu0
    %v446 = vadd.f32 %v157, %v320
    %v447 = vadd.f32 %v158, %v323
    %v448 = vadd.f32 %v159, %v328
    %v449 = vadd.f32 %v160, %v331
    %v450 = vadd.f32 %v161, %v336
    %v451 = vadd.f32 %v162, %v339
    %v452 = vadd.f32 %v163, %v344
    %v453 = vadd.f32 %v164, %v347
    %v454 = vadd.f32 %v165, %v352
    %v455 = vadd.f32 %v166, %v355
    %v456 = vadd.f32 %v167, %v360
    %v457 = vadd.f32 %v168, %v363
    %v458 = vadd.f32 %v169, %v368
    %v459 = vadd.f32 %v170, %v371
    %v460 = vadd.f32 %v171, %v376
    %v461 = vadd.f32 %v172, %v379
    %v462 = vadd.f32 %v173, %v384
    %v463 = vadd.f32 %v174, %v387
    %v464 = vadd.f32 %v175, %v392
    %v465 = vadd.f32 %v176, %v395
    %v466 = vadd.f32 %v177, %v400
    %v467 = vadd.f32 %v178, %v403
    %v468 = vadd.f32 %v179, %v408
    %v469 = vadd.f32 %v180, %v411
    %v470 = vadd.f32 %v181, %v416
    %v471 = vadd.f32 %v182, %v419
    %v472 = vadd.f32 %v183, %v424
    %v473 = vadd.f32 %v184, %v427
    %v474 = vadd.f32 %v185, %v432
    %v475 = vadd.f32 %v186, %v435
    %v476 = vadd.f32 %v187, %v440
    %v477 = vadd.f32 %v188, %v443
    %478 = vst [vmem:[#allocation2] sm:$0xff] %v446
    %479 = vst [vmem:[#allocation2 + $0x8] sm:$0xff] %v447
    %480 = vst [vmem:[#allocation2 + $0x10] sm:$0xff] %v448
    %481 = vst [vmem:[#allocation2 + $0x18] sm:$0xff] %v449
    %482 = vst [vmem:[#allocation2 + $0x20] sm:$0xff] %v450
    %483 = vst [vmem:[#allocation2 + $0x28] sm:$0xff] %v451
    %484 = vst [vmem:[#allocation2 + $0x30] sm:$0xff] %v452
    %485 = vst [vmem:[#allocation2 + $0x38] sm:$0xff] %v453
    %486 = vst [vmem:[#allocation2 + $0x40] sm:$0xff] %v454
    %487 = vst [vmem:[#allocation2 + $0x48] sm:$0xff] %v455
    %488 = vst [vmem:[#allocation2 + $0x50] sm:$0xff] %v456
    %489 = vst [vmem:[#allocation2 + $0x58] sm:$0xff] %v457
    %490 = vst [vmem:[#allocation2 + $0x60] sm:$0xff] %v458
    %491 = vst [vmem:[#allocation2 + $0x68] sm:$0xff] %v459
    %492 = vst [vmem:[#allocation2 + $0x70] sm:$0xff] %v460
    %493 = vst [vmem:[#allocation2 + $0x78] sm:$0xff] %v461
    %494 = vst [vmem:[#allocation2 + $0x80] sm:$0xff] %v462
    %495 = vst [vmem:[#allocation2 + $0x88] sm:$0xff] %v463
    %496 = vst [vmem:[#allocation2 + $0x90] sm:$0xff] %v464
    %497 = vst [vmem:[#allocation2 + $0x98] sm:$0xff] %v465
    %498 = vst [vmem:[#allocation2 + $0xa0] sm:$0xff] %v466
    %499 = vst [vmem:[#allocation2 + $0xa8] sm:$0xff] %v467
    %500 = vst [vmem:[#allocation2 + $0xb0] sm:$0xff] %v468
    %501 = vst [vmem:[#allocation2 + $0xb8] sm:$0xff] %v469
    %502 = vst [vmem:[#allocation2 + $0xc0] sm:$0xff] %v470
    %503 = vst [vmem:[#allocation2 + $0xc8] sm:$0xff] %v471
    %504 = vst [vmem:[#allocation2 + $0xd0] sm:$0xff] %v472
    %505 = vst [vmem:[#allocation2 + $0xd8] sm:$0xff] %v473
    %506 = vst [vmem:[#allocation2 + $0xe0] sm:$0xff] %v474
    %507 = vst [vmem:[#allocation2 + $0xe8] sm:$0xff] %v475
    %508 = vst [vmem:[#allocation2 + $0xf0] sm:$0xff] %v476
    %509 = vst [vmem:[#allocation2 + $0xf8] sm:$0xff] %v477
    // Predicated region
    $region30: #{tpu_custom_call.1} parent=1 // pred_check
      %p510 = pneg %p36
    $region31: #{tpu_custom_call.1} parent=1 // pred_check_branch
      %512 = sbr.rel (%p510) target = $region33
    $region32: #{tpu_custom_call.1} parent=1 // pred_region
      %v513 = vld [vmem:[%s2] sm:$0xff]
      %v514 = vld [vmem:[%s2 + $0x8] sm:$0xff]
      %v515 = vld [vmem:[%s2 + $0x10] sm:$0xff]
      %v516 = vld [vmem:[%s2 + $0x18] sm:$0xff]
      %v517 = vld [vmem:[%s2 + $0x20] sm:$0xff]
      %v518 = vld [vmem:[%s2 + $0x28] sm:$0xff]
      %v519 = vld [vmem:[%s2 + $0x30] sm:$0xff]
      %v520 = vld [vmem:[%s2 + $0x38] sm:$0xff]
      %v521 = vld [vmem:[%s2 + $0x40] sm:$0xff]
      %v522 = vld [vmem:[%s2 + $0x48] sm:$0xff]
      %v523 = vld [vmem:[%s2 + $0x50] sm:$0xff]
      %v524 = vld [vmem:[%s2 + $0x58] sm:$0xff]
      %v525 = vld [vmem:[%s2 + $0x60] sm:$0xff]
      %v526 = vld [vmem:[%s2 + $0x68] sm:$0xff]
      %v527 = vld [vmem:[%s2 + $0x70] sm:$0xff]
      %v528 = vld [vmem:[%s2 + $0x78] sm:$0xff]
      %v529 = vld [vmem:[%s2 + $0x80] sm:$0xff]
      %v530 = vld [vmem:[%s2 + $0x88] sm:$0xff]
      %v531 = vld [vmem:[%s2 + $0x90] sm:$0xff]
      %v532 = vld [vmem:[%s2 + $0x98] sm:$0xff]
      %v533 = vld [vmem:[%s2 + $0xa0] sm:$0xff]
      %v534 = vld [vmem:[%s2 + $0xa8] sm:$0xff]
      %v535 = vld [vmem:[%s2 + $0xb0] sm:$0xff]
      %v536 = vld [vmem:[%s2 + $0xb8] sm:$0xff]
      %v537 = vld [vmem:[%s2 + $0xc0] sm:$0xff]
      %v538 = vld [vmem:[%s2 + $0xc8] sm:$0xff]
      %v539 = vld [vmem:[%s2 + $0xd0] sm:$0xff]
      %v540 = vld [vmem:[%s2 + $0xd8] sm:$0xff]
      %v541 = vld [vmem:[%s2 + $0xe0] sm:$0xff]
      %v542 = vld [vmem:[%s2 + $0xe8] sm:$0xff]
      %v543 = vld [vmem:[%s2 + $0xf0] sm:$0xff]
      %v544 = vld [vmem:[%s2 + $0xf8] sm:$0xff]
      %v545 = vld [vmem:[#allocation2] sm:$0xff]
      %v546 = vld [vmem:[#allocation2 + $0x8] sm:$0xff]
      %v547 = vld [vmem:[#allocation2 + $0x10] sm:$0xff]
      %v548 = vld [vmem:[#allocation2 + $0x18] sm:$0xff]
      %v549 = vld [vmem:[#allocation2 + $0x20] sm:$0xff]
      %v550 = vld [vmem:[#allocation2 + $0x28] sm:$0xff]
      %v551 = vld [vmem:[#allocation2 + $0x30] sm:$0xff]
      %v552 = vld [vmem:[#allocation2 + $0x38] sm:$0xff]
      %v553 = vld [vmem:[#allocation2 + $0x40] sm:$0xff]
      %v554 = vld [vmem:[#allocation2 + $0x48] sm:$0xff]
      %v555 = vld [vmem:[#allocation2 + $0x50] sm:$0xff]
      %v556 = vld [vmem:[#allocation2 + $0x58] sm:$0xff]
      %v557 = vld [vmem:[#allocation2 + $0x60] sm:$0xff]
      %v558 = vld [vmem:[#allocation2 + $0x68] sm:$0xff]
      %v559 = vld [vmem:[#allocation2 + $0x70] sm:$0xff]
      %v560 = vld [vmem:[#allocation2 + $0x78] sm:$0xff]
      %v561 = vld [vmem:[#allocation2 + $0x80] sm:$0xff]
      %v562 = vld [vmem:[#allocation2 + $0x88] sm:$0xff]
      %v563 = vld [vmem:[#allocation2 + $0x90] sm:$0xff]
      %v564 = vld [vmem:[#allocation2 + $0x98] sm:$0xff]
      %v565 = vld [vmem:[#allocation2 + $0xa0] sm:$0xff]
      %v566 = vld [vmem:[#allocation2 + $0xa8] sm:$0xff]
      %v567 = vld [vmem:[#allocation2 + $0xb0] sm:$0xff]
      %v568 = vld [vmem:[#allocation2 + $0xb8] sm:$0xff]
      %v569 = vld [vmem:[#allocation2 + $0xc0] sm:$0xff]
      %v570 = vld [vmem:[#allocation2 + $0xc8] sm:$0xff]
      %v571 = vld [vmem:[#allocation2 + $0xd0] sm:$0xff]
      %v572 = vld [vmem:[#allocation2 + $0xd8] sm:$0xff]
      %v573 = vld [vmem:[#allocation2 + $0xe0] sm:$0xff]
      %v574 = vld [vmem:[#allocation2 + $0xe8] sm:$0xff]
      %v575 = vld [vmem:[#allocation2 + $0xf0] sm:$0xff]
      %v576 = vld [vmem:[#allocation2 + $0xf8] sm:$0xff]
      %578 = vset.pattern.permute.xlu0 0
      %579 = vperm.xlu0 %578, %v513
      %v580 = vpop.permute.xlu0 %579
      %583 = vset.pattern.permute.xlu0 0
      %584 = vperm.xlu0 %583, %v514
      %v585 = vpop.permute.xlu0 %584
      %588 = vset.pattern.permute.xlu0 0
      %589 = vperm.xlu0 %588, %v515
      %v590 = vpop.permute.xlu0 %589
      %593 = vset.pattern.permute.xlu0 0
      %594 = vperm.xlu0 %593, %v516
      %v595 = vpop.permute.xlu0 %594
      %598 = vset.pattern.permute.xlu0 0
      %599 = vperm.xlu0 %598, %v517
      %v600 = vpop.permute.xlu0 %599
      %603 = vset.pattern.permute.xlu0 0
      %604 = vperm.xlu0 %603, %v518
      %v605 = vpop.permute.xlu0 %604
      %608 = vset.pattern.permute.xlu0 0
      %609 = vperm.xlu0 %608, %v519
      %v610 = vpop.permute.xlu0 %609
      %613 = vset.pattern.permute.xlu0 0
      %614 = vperm.xlu0 %613, %v520
      %v615 = vpop.permute.xlu0 %614
      %618 = vset.pattern.permute.xlu0 0
      %619 = vperm.xlu0 %618, %v521
      %v620 = vpop.permute.xlu0 %619
      %623 = vset.pattern.permute.xlu0 0
      %624 = vperm.xlu0 %623, %v522
      %v625 = vpop.permute.xlu0 %624
      %628 = vset.pattern.permute.xlu0 0
      %629 = vperm.xlu0 %628, %v523
      %v630 = vpop.permute.xlu0 %629
      %633 = vset.pattern.permute.xlu0 0
      %634 = vperm.xlu0 %633, %v524
      %v635 = vpop.permute.xlu0 %634
      %638 = vset.pattern.permute.xlu0 0
      %639 = vperm.xlu0 %638, %v525
      %v640 = vpop.permute.xlu0 %639
      %643 = vset.pattern.permute.xlu0 0
      %644 = vperm.xlu0 %643, %v526
      %v645 = vpop.permute.xlu0 %644
      %648 = vset.pattern.permute.xlu0 0
      %649 = vperm.xlu0 %648, %v527
      %v650 = vpop.permute.xlu0 %649
      %653 = vset.pattern.permute.xlu0 0
      %654 = vperm.xlu0 %653, %v528
      %v655 = vpop.permute.xlu0 %654
      %658 = vset.pattern.permute.xlu0 0
      %659 = vperm.xlu0 %658, %v529
      %v660 = vpop.permute.xlu0 %659
      %663 = vset.pattern.permute.xlu0 0
      %664 = vperm.xlu0 %663, %v530
      %v665 = vpop.permute.xlu0 %664
      %668 = vset.pattern.permute.xlu0 0
      %669 = vperm.xlu0 %668, %v531
      %v670 = vpop.permute.xlu0 %669
      %673 = vset.pattern.permute.xlu0 0
      %674 = vperm.xlu0 %673, %v532
      %v675 = vpop.permute.xlu0 %674
      %678 = vset.pattern.permute.xlu0 0
      %679 = vperm.xlu0 %678, %v533
      %v680 = vpop.permute.xlu0 %679
      %683 = vset.pattern.permute.xlu0 0
      %684 = vperm.xlu0 %683, %v534
      %v685 = vpop.permute.xlu0 %684
      %688 = vset.pattern.permute.xlu0 0
      %689 = vperm.xlu0 %688, %v535
      %v690 = vpop.permute.xlu0 %689
      %693 = vset.pattern.permute.xlu0 0
      %694 = vperm.xlu0 %693, %v536
      %v695 = vpop.permute.xlu0 %694
      %698 = vset.pattern.permute.xlu0 0
      %699 = vperm.xlu0 %698, %v537
      %v700 = vpop.permute.xlu0 %699
      %703 = vset.pattern.permute.xlu0 0
      %704 = vperm.xlu0 %703, %v538
      %v705 = vpop.permute.xlu0 %704
      %708 = vset.pattern.permute.xlu0 0
      %709 = vperm.xlu0 %708, %v539
      %v710 = vpop.permute.xlu0 %709
      %713 = vset.pattern.permute.xlu0 0
      %714 = vperm.xlu0 %713, %v540
      %v715 = vpop.permute.xlu0 %714
      %718 = vset.pattern.permute.xlu0 0
      %719 = vperm.xlu0 %718, %v541
      %v720 = vpop.permute.xlu0 %719
      %723 = vset.pattern.permute.xlu0 0
      %724 = vperm.xlu0 %723, %v542
      %v725 = vpop.permute.xlu0 %724
      %728 = vset.pattern.permute.xlu0 0
      %729 = vperm.xlu0 %728, %v543
      %v730 = vpop.permute.xlu0 %729
      %733 = vset.pattern.permute.xlu0 0
      %734 = vperm.xlu0 %733, %v544
      %v735 = vpop.permute.xlu0 %734
      %v737 = vmul.f32 %v545, %v580
      %v738 = vmul.f32 %v546, %v585
      %v739 = vmul.f32 %v547, %v590
      %v740 = vmul.f32 %v548, %v595
      %v741 = vmul.f32 %v549, %v600
      %v742 = vmul.f32 %v550, %v605
      %v743 = vmul.f32 %v551, %v610
      %v744 = vmul.f32 %v552, %v615
      %v745 = vmul.f32 %v553, %v620
      %v746 = vmul.f32 %v554, %v625
      %v747 = vmul.f32 %v555, %v630
      %v748 = vmul.f32 %v556, %v635
      %v749 = vmul.f32 %v557, %v640
      %v750 = vmul.f32 %v558, %v645
      %v751 = vmul.f32 %v559, %v650
      %v752 = vmul.f32 %v560, %v655
      %v753 = vmul.f32 %v561, %v660
      %v754 = vmul.f32 %v562, %v665
      %v755 = vmul.f32 %v563, %v670
      %v756 = vmul.f32 %v564, %v675
      %v757 = vmul.f32 %v565, %v680
      %v758 = vmul.f32 %v566, %v685
      %v759 = vmul.f32 %v567, %v690
      %v760 = vmul.f32 %v568, %v695
      %v761 = vmul.f32 %v569, %v700
      %v762 = vmul.f32 %v570, %v705
      %v763 = vmul.f32 %v571, %v710
      %v764 = vmul.f32 %v572, %v715
      %v765 = vmul.f32 %v573, %v720
      %v766 = vmul.f32 %v574, %v725
      %v767 = vmul.f32 %v575, %v730
      %v768 = vmul.f32 %v576, %v735
      %v769 = vld [vmem:[%s3] sm:$0x1]
      %v771 = vlaneseq
      %v772 = vshrl.u32 %v771, 7
      %v773 = vsub.s32 0, %v772
      %v774 = vrot.slane %v769, %v773
      %v776 = vadd.f32 %v737, %v774
      %v777 = vadd.f32 %v738, %v774
      %v778 = vadd.f32 %v739, %v774
      %v779 = vadd.f32 %v740, %v774
      %v780 = vadd.f32 %v741, %v774
      %v781 = vadd.f32 %v742, %v774
      %v782 = vadd.f32 %v743, %v774
      %v783 = vadd.f32 %v744, %v774
      %v784 = vadd.f32 %v745, %v774
      %v785 = vadd.f32 %v746, %v774
      %v786 = vadd.f32 %v747, %v774
      %v787 = vadd.f32 %v748, %v774
      %v788 = vadd.f32 %v749, %v774
      %v789 = vadd.f32 %v750, %v774
      %v790 = vadd.f32 %v751, %v774
      %v791 = vadd.f32 %v752, %v774
      %v792 = vadd.f32 %v753, %v774
      %v793 = vadd.f32 %v754, %v774
      %v794 = vadd.f32 %v755, %v774
      %v795 = vadd.f32 %v756, %v774
      %v796 = vadd.f32 %v757, %v774
      %v797 = vadd.f32 %v758, %v774
      %v798 = vadd.f32 %v759, %v774
      %v799 = vadd.f32 %v760, %v774
      %v800 = vadd.f32 %v761, %v774
      %v801 = vadd.f32 %v762, %v774
      %v802 = vadd.f32 %v763, %v774
      %v803 = vadd.f32 %v764, %v774
      %v804 = vadd.f32 %v765, %v774
      %v805 = vadd.f32 %v766, %v774
      %v806 = vadd.f32 %v767, %v774
      %v807 = vadd.f32 %v768, %v774
      %v808 = vmax.f32 %v776, 0.0
      %v809 = vmax.f32 %v777, 0.0
      %v810 = vmax.f32 %v778, 0.0
      %v811 = vmax.f32 %v779, 0.0
      %v812 = vmax.f32 %v780, 0.0
      %v813 = vmax.f32 %v781, 0.0
      %v814 = vmax.f32 %v782, 0.0
      %v815 = vmax.f32 %v783, 0.0
      %v816 = vmax.f32 %v784, 0.0
      %v817 = vmax.f32 %v785, 0.0
      %v818 = vmax.f32 %v786, 0.0
      %v819 = vmax.f32 %v787, 0.0
      %v820 = vmax.f32 %v788, 0.0
      %v821 = vmax.f32 %v789, 0.0
      %v822 = vmax.f32 %v790, 0.0
      %v823 = vmax.f32 %v791, 0.0
      %v824 = vmax.f32 %v792, 0.0
      %v825 = vmax.f32 %v793, 0.0
      %v826 = vmax.f32 %v794, 0.0
      %v827 = vmax.f32 %v795, 0.0
      %v828 = vmax.f32 %v796, 0.0
      %v829 = vmax.f32 %v797, 0.0
      %v830 = vmax.f32 %v798, 0.0
      %v831 = vmax.f32 %v799, 0.0
      %v832 = vmax.f32 %v800, 0.0
      %v833 = vmax.f32 %v801, 0.0
      %v834 = vmax.f32 %v802, 0.0
      %v835 = vmax.f32 %v803, 0.0
      %v836 = vmax.f32 %v804, 0.0
      %v837 = vmax.f32 %v805, 0.0
      %v838 = vmax.f32 %v806, 0.0
      %v839 = vmax.f32 %v807, 0.0
      %v840 = vpack.c.bf16 %v809, %v808
      %v841 = vpack.c.bf16 %v811, %v810
      %v842 = vpack.c.bf16 %v813, %v812
      %v843 = vpack.c.bf16 %v815, %v814
      %v844 = vpack.c.bf16 %v817, %v816
      %v845 = vpack.c.bf16 %v819, %v818
      %v846 = vpack.c.bf16 %v821, %v820
      %v847 = vpack.c.bf16 %v823, %v822
      %v848 = vpack.c.bf16 %v825, %v824
      %v849 = vpack.c.bf16 %v827, %v826
      %v850 = vpack.c.bf16 %v829, %v828
      %v851 = vpack.c.bf16 %v831, %v830
      %v852 = vpack.c.bf16 %v833, %v832
      %v853 = vpack.c.bf16 %v835, %v834
      %v854 = vpack.c.bf16 %v837, %v836
      %v855 = vpack.c.bf16 %v839, %v838
      %v856 = vld [vmem:[#allocation3] sm:$0xf]
      %v857 = vld [vmem:[#allocation3 + $0x4] sm:$0xf]
      %v858 = vld [vmem:[#allocation3 + $0x8] sm:$0xf]
      %v859 = vld [vmem:[#allocation3 + $0xc] sm:$0xf]
      %v860 = vld [vmem:[#allocation3 + $0x10] sm:$0xf]
      %v861 = vld [vmem:[#allocation3 + $0x14] sm:$0xf]
      %v862 = vld [vmem:[#allocation3 + $0x18] sm:$0xf]
      %v863 = vld [vmem:[#allocation3 + $0x1c] sm:$0xf]
      %v864 = vld [vmem:[#allocation3 + $0x20] sm:$0xf]
      %v865 = vld [vmem:[#allocation3 + $0x24] sm:$0xf]
      %v866 = vld [vmem:[#allocation3 + $0x28] sm:$0xf]
      %v867 = vld [vmem:[#allocation3 + $0x2c] sm:$0xf]
      %v868 = vld [vmem:[#allocation3 + $0x30] sm:$0xf]
      %v869 = vld [vmem:[#allocation3 + $0x34] sm:$0xf]
      %v870 = vld [vmem:[#allocation3 + $0x38] sm:$0xf]
      %v871 = vld [vmem:[#allocation3 + $0x3c] sm:$0xf]
      %v888 = vunpack.c.l.b16 %v856
      %v889 = vunpack.c.l.b16 %v857
      %v890 = vunpack.c.l.b16 %v858
      %v891 = vunpack.c.l.b16 %v859
      %v892 = vunpack.c.l.b16 %v860
      %v893 = vunpack.c.l.b16 %v861
      %v894 = vunpack.c.l.b16 %v862
      %v895 = vunpack.c.l.b16 %v863
      %v896 = vunpack.c.l.b16 %v864
      %v897 = vunpack.c.l.b16 %v865
      %v898 = vunpack.c.l.b16 %v866
      %v899 = vunpack.c.l.b16 %v867
      %v900 = vunpack.c.l.b16 %v868
      %v901 = vunpack.c.l.b16 %v869
      %v902 = vunpack.c.l.b16 %v870
      %v903 = vunpack.c.l.b16 %v871
      %v904 = vpack.c.b16 %v889, %v888
      %v905 = vpack.c.b16 %v891, %v890
      %v906 = vpack.c.b16 %v893, %v892
      %v907 = vpack.c.b16 %v895, %v894
      %v908 = vpack.c.b16 %v897, %v896
      %v909 = vpack.c.b16 %v899, %v898
      %v910 = vpack.c.b16 %v901, %v900
      %v911 = vpack.c.b16 %v903, %v902
      %920 = vmatprep.subr.bf16.mxu0 0
      %921 = vmatpush1.bf16.msra.mxu0 %v904
      %922 = vmatprep.subr.bf16.mxu0 0
      %923 = vmatpush1.bf16.msra.mxu0 %v905
      %924 = vmatprep.subr.bf16.mxu0 0
      %925 = vmatpush1.bf16.msra.mxu0 %v906
      %926 = vmatprep.subr.bf16.mxu0 0
      %927 = vmatpush1.bf16.msra.mxu0 %v907
      %928 = vmatprep.subr.bf16.mxu0 0
      %929 = vmatpush1.bf16.msra.mxu0 %v908
      %930 = vmatprep.subr.bf16.mxu0 0
      %931 = vmatpush1.bf16.msra.mxu0 %v909
      %932 = vmatprep.subr.bf16.mxu0 0
      %933 = vmatpush1.bf16.msra.mxu0 %v910
      %934 = vmatprep.subr.bf16.mxu0 0
      %935 = vmatpush1.bf16.msra.mxu0 %v911
      %936 = vmatprep.subr.bf16.mxu0 0
      %937 = vmatpush1.bf16.msra.mxu0 0
      %938 = vmatprep.subr.bf16.mxu0 0
      %939 = vmatpush1.bf16.msra.mxu0 0
      %940 = vmatprep.subr.bf16.mxu0 0
      %941 = vmatpush1.bf16.msra.mxu0 0
      %942 = vmatprep.subr.bf16.mxu0 0
      %943 = vmatpush1.bf16.msra.mxu0 0
      %944 = vmatprep.subr.bf16.mxu0 0
      %945 = vmatpush1.bf16.msra.mxu0 0
      %946 = vmatprep.subr.bf16.mxu0 0
      %947 = vmatpush1.bf16.msra.mxu0 0
      %948 = vmatprep.subr.bf16.mxu0 0
      %949 = vmatpush1.bf16.msra.mxu0 0
      %950 = vmatprep.subr.bf16.mxu0 0
      %951 = vmatpush1.bf16.msra.mxu0 0
      %952 = vmatprep.mubr.bf16.mxu0 0
      %953 = vmatmul.mubr.bf16.gmra.mrb[0].mxu0 %v840
      %v954 = vpop.f32.mrb[0].mxu0
      %v955 = vadd.f32 0.0, %v954
      %v956 = vpop.f32.mrb[0].mxu0
      %v957 = vpop.f32.mrb[0].mxu0
      %v958 = vadd.f32 0.0, %v957
      %v959 = vpop.f32.mrb[0].mxu0
      %960 = vmatprep.mubr.bf16.mxu0 0
      %961 = vmatmul.mubr.bf16.gmra.mrb[0].mxu0 %v841
      %v962 = vpop.f32.mrb[0].mxu0
      %v963 = vadd.f32 0.0, %v962
      %v964 = vpop.f32.mrb[0].mxu0
      %v965 = vpop.f32.mrb[0].mxu0
      %v966 = vadd.f32 0.0, %v965
      %v967 = vpop.f32.mrb[0].mxu0
      %968 = vmatprep.mubr.bf16.mxu0 0
      %969 = vmatmul.mubr.bf16.gmra.mrb[0].mxu0 %v842
      %v970 = vpop.f32.mrb[0].mxu0
      %v971 = vadd.f32 0.0, %v970
      %v972 = vpop.f32.mrb[0].mxu0
      %v973 = vpop.f32.mrb[0].mxu0
      %v974 = vadd.f32 0.0, %v973
      %v975 = vpop.f32.mrb[0].mxu0
      %976 = vmatprep.mubr.bf16.mxu0 0
      %977 = vmatmul.mubr.bf16.gmra.mrb[0].mxu0 %v843
      %v978 = vpop.f32.mrb[0].mxu0
      %v979 = vadd.f32 0.0, %v978
      %v980 = vpop.f32.mrb[0].mxu0
      %v981 = vpop.f32.mrb[0].mxu0
      %v982 = vadd.f32 0.0, %v981
      %v983 = vpop.f32.mrb[0].mxu0
      %984 = vmatprep.mubr.bf16.mxu0 0
      %985 = vmatmul.mubr.bf16.gmra.mrb[0].mxu0 %v844
      %v986 = vpop.f32.mrb[0].mxu0
      %v987 = vadd.f32 0.0, %v986
      %v988 = vpop.f32.mrb[0].mxu0
      %v989 = vpop.f32.mrb[0].mxu0
      %v990 = vadd.f32 0.0, %v989
      %v991 = vpop.f32.mrb[0].mxu0
      %992 = vmatprep.mubr.bf16.mxu0 0
      %993 = vmatmul.mubr.bf16.gmra.mrb[0].mxu0 %v845
      %v994 = vpop.f32.mrb[0].mxu0
      %v995 = vadd.f32 0.0, %v994
      %v996 = vpop.f32.mrb[0].mxu0
      %v997 = vpop.f32.mrb[0].mxu0
      %v998 = vadd.f32 0.0, %v997
      %v999 = vpop.f32.mrb[0].mxu0
      %1000 = vmatprep.mubr.bf16.mxu0 0
      %1001 = vmatmul.mubr.bf16.gmra.mrb[0].mxu0 %v846
      %v1002 = vpop.f32.mrb[0].mxu0
      %v1003 = vadd.f32 0.0, %v1002
      %v1004 = vpop.f32.mrb[0].mxu0
      %v1005 = vpop.f32.mrb[0].mxu0
      %v1006 = vadd.f32 0.0, %v1005
      %v1007 = vpop.f32.mrb[0].mxu0
      %1008 = vmatprep.mubr.bf16.mxu0 0
      %1009 = vmatmul.mubr.bf16.gmra.mrb[0].mxu0 %v847
      %v1010 = vpop.f32.mrb[0].mxu0
      %v1011 = vadd.f32 0.0, %v1010
      %v1012 = vpop.f32.mrb[0].mxu0
      %v1013 = vpop.f32.mrb[0].mxu0
      %v1014 = vadd.f32 0.0, %v1013
      %v1015 = vpop.f32.mrb[0].mxu0
      %1016 = vmatprep.mubr.bf16.mxu0 0
      %1017 = vmatmul.mubr.bf16.gmra.mrb[0].mxu0 %v848
      %v1018 = vpop.f32.mrb[0].mxu0
      %v1019 = vadd.f32 0.0, %v1018
      %v1020 = vpop.f32.mrb[0].mxu0
      %v1021 = vpop.f32.mrb[0].mxu0
      %v1022 = vadd.f32 0.0, %v1021
      %v1023 = vpop.f32.mrb[0].mxu0
      %1024 = vmatprep.mubr.bf16.mxu0 0
      %1025 = vmatmul.mubr.bf16.gmra.mrb[0].mxu0 %v849
      %v1026 = vpop.f32.mrb[0].mxu0
      %v1027 = vadd.f32 0.0, %v1026
      %v1028 = vpop.f32.mrb[0].mxu0
      %v1029 = vpop.f32.mrb[0].mxu0
      %v1030 = vadd.f32 0.0, %v1029
      %v1031 = vpop.f32.mrb[0].mxu0
      %1032 = vmatprep.mubr.bf16.mxu0 0
      %1033 = vmatmul.mubr.bf16.gmra.mrb[0].mxu0 %v850
      %v1034 = vpop.f32.mrb[0].mxu0
      %v1035 = vadd.f32 0.0, %v1034
      %v1036 = vpop.f32.mrb[0].mxu0
      %v1037 = vpop.f32.mrb[0].mxu0
      %v1038 = vadd.f32 0.0, %v1037
      %v1039 = vpop.f32.mrb[0].mxu0
      %1040 = vmatprep.mubr.bf16.mxu0 0
      %1041 = vmatmul.mubr.bf16.gmra.mrb[0].mxu0 %v851
      %v1042 = vpop.f32.mrb[0].mxu0
      %v1043 = vadd.f32 0.0, %v1042
      %v1044 = vpop.f32.mrb[0].mxu0
      %v1045 = vpop.f32.mrb[0].mxu0
      %v1046 = vadd.f32 0.0, %v1045
      %v1047 = vpop.f32.mrb[0].mxu0
      %1048 = vmatprep.mubr.bf16.mxu0 0
      %1049 = vmatmul.mubr.bf16.gmra.mrb[0].mxu0 %v852
      %v1050 = vpop.f32.mrb[0].mxu0
      %v1051 = vadd.f32 0.0, %v1050
      %v1052 = vpop.f32.mrb[0].mxu0
      %v1053 = vpop.f32.mrb[0].mxu0
      %v1054 = vadd.f32 0.0, %v1053
      %v1055 = vpop.f32.mrb[0].mxu0
      %1056 = vmatprep.mubr.bf16.mxu0 0
      %1057 = vmatmul.mubr.bf16.gmra.mrb[0].mxu0 %v853
      %v1058 = vpop.f32.mrb[0].mxu0
      %v1059 = vadd.f32 0.0, %v1058
      %v1060 = vpop.f32.mrb[0].mxu0
      %v1061 = vpop.f32.mrb[0].mxu0
      %v1062 = vadd.f32 0.0, %v1061
      %v1063 = vpop.f32.mrb[0].mxu0
      %1064 = vmatprep.mubr.bf16.mxu0 0
      %1065 = vmatmul.mubr.bf16.gmra.mrb[0].mxu0 %v854
      %v1066 = vpop.f32.mrb[0].mxu0
      %v1067 = vadd.f32 0.0, %v1066
      %v1068 = vpop.f32.mrb[0].mxu0
      %v1069 = vpop.f32.mrb[0].mxu0
      %v1070 = vadd.f32 0.0, %v1069
      %v1071 = vpop.f32.mrb[0].mxu0
      %1072 = vmatprep.mubr.bf16.mxu0 0
      %1073 = vmatmul.mubr.bf16.gmra.mrb[0].mxu0 %v855
      %v1074 = vpop.f32.mrb[0].mxu0
      %v1075 = vadd.f32 0.0, %v1074
      %v1076 = vpop.f32.mrb[0].mxu0
      %v1077 = vpop.f32.mrb[0].mxu0
      %v1078 = vadd.f32 0.0, %v1077
      %v1079 = vpop.f32.mrb[0].mxu0
      %1080 = vdwg.mxu0
      %v1081 = vmul.f32 %v955, %v580
      %v1082 = vmul.f32 %v958, %v585
      %v1083 = vmul.f32 %v963, %v590
      %v1084 = vmul.f32 %v966, %v595
      %v1085 = vmul.f32 %v971, %v600
      %v1086 = vmul.f32 %v974, %v605
      %v1087 = vmul.f32 %v979, %v610
      %v1088 = vmul.f32 %v982, %v615
      %v1089 = vmul.f32 %v987, %v620
      %v1090 = vmul.f32 %v990, %v625
      %v1091 = vmul.f32 %v995, %v630
      %v1092 = vmul.f32 %v998, %v635
      %v1093 = vmul.f32 %v1003, %v640
      %v1094 = vmul.f32 %v1006, %v645
      %v1095 = vmul.f32 %v1011, %v650
      %v1096 = vmul.f32 %v1014, %v655
      %v1097 = vmul.f32 %v1019, %v660
      %v1098 = vmul.f32 %v1022, %v665
      %v1099 = vmul.f32 %v1027, %v670
      %v1100 = vmul.f32 %v1030, %v675
      %v1101 = vmul.f32 %v1035, %v680
      %v1102 = vmul.f32 %v1038, %v685
      %v1103 = vmul.f32 %v1043, %v690
      %v1104 = vmul.f32 %v1046, %v695
      %v1105 = vmul.f32 %v1051, %v700
      %v1106 = vmul.f32 %v1054, %v705
      %v1107 = vmul.f32 %v1059, %v710
      %v1108 = vmul.f32 %v1062, %v715
      %v1109 = vmul.f32 %v1067, %v720
      %v1110 = vmul.f32 %v1070, %v725
      %v1111 = vmul.f32 %v1075, %v730
      %v1112 = vmul.f32 %v1078, %v735
      %v1113 = vpack.c.bf16 %v1082, %v1081
      %v1114 = vpack.c.bf16 %v1084, %v1083
      %v1115 = vpack.c.bf16 %v1086, %v1085
      %v1116 = vpack.c.bf16 %v1088, %v1087
      %v1117 = vpack.c.bf16 %v1090, %v1089
      %v1118 = vpack.c.bf16 %v1092, %v1091
      %v1119 = vpack.c.bf16 %v1094, %v1093
      %v1120 = vpack.c.bf16 %v1096, %v1095
      %v1121 = vpack.c.bf16 %v1098, %v1097
      %v1122 = vpack.c.bf16 %v1100, %v1099
      %v1123 = vpack.c.bf16 %v1102, %v1101
      %v1124 = vpack.c.bf16 %v1104, %v1103
      %v1125 = vpack.c.bf16 %v1106, %v1105
      %v1126 = vpack.c.bf16 %v1108, %v1107
      %v1127 = vpack.c.bf16 %v1110, %v1109
      %v1128 = vpack.c.bf16 %v1112, %v1111
      %v1145 = vunpack.c.l.b16 %v1113
      %v1146 = vunpack.c.h.b16 %v1113
      %v1147 = vunpack.c.l.b16 %v1114
      %v1148 = vunpack.c.h.b16 %v1114
      %v1149 = vunpack.c.l.b16 %v1115
      %v1150 = vunpack.c.h.b16 %v1115
      %v1151 = vunpack.c.l.b16 %v1116
      %v1152 = vunpack.c.h.b16 %v1116
      %v1153 = vunpack.c.l.b16 %v1117
      %v1154 = vunpack.c.h.b16 %v1117
      %v1155 = vunpack.c.l.b16 %v1118
      %v1156 = vunpack.c.h.b16 %v1118
      %v1157 = vunpack.c.l.b16 %v1119
      %v1158 = vunpack.c.h.b16 %v1119
      %v1159 = vunpack.c.l.b16 %v1120
      %v1160 = vunpack.c.h.b16 %v1120
      %v1161 = vunpack.c.l.b16 %v1121
      %v1162 = vunpack.c.h.b16 %v1121
      %v1163 = vunpack.c.l.b16 %v1122
      %v1164 = vunpack.c.h.b16 %v1122
      %v1165 = vunpack.c.l.b16 %v1123
      %v1166 = vunpack.c.h.b16 %v1123
      %v1167 = vunpack.c.l.b16 %v1124
      %v1168 = vunpack.c.h.b16 %v1124
      %v1169 = vunpack.c.l.b16 %v1125
      %v1170 = vunpack.c.h.b16 %v1125
      %v1171 = vunpack.c.l.b16 %v1126
      %v1172 = vunpack.c.h.b16 %v1126
      %v1173 = vunpack.c.l.b16 %v1127
      %v1174 = vunpack.c.h.b16 %v1127
      %v1175 = vunpack.c.l.b16 %v1128
      %v1176 = vunpack.c.h.b16 %v1128
      %v1177 = vpack.c.b16 %v1145, %v1145
      %v1178 = vpack.c.b16 %v1146, %v1146
      %v1179 = vpack.c.b16 %v1147, %v1147
      %v1180 = vpack.c.b16 %v1148, %v1148
      %v1181 = vpack.c.b16 %v1149, %v1149
      %v1182 = vpack.c.b16 %v1150, %v1150
      %v1183 = vpack.c.b16 %v1151, %v1151
      %v1184 = vpack.c.b16 %v1152, %v1152
      %v1185 = vpack.c.b16 %v1153, %v1153
      %v1186 = vpack.c.b16 %v1154, %v1154
      %v1187 = vpack.c.b16 %v1155, %v1155
      %v1188 = vpack.c.b16 %v1156, %v1156
      %v1189 = vpack.c.b16 %v1157, %v1157
      %v1190 = vpack.c.b16 %v1158, %v1158
      %v1191 = vpack.c.b16 %v1159, %v1159
      %v1192 = vpack.c.b16 %v1160, %v1160
      %v1193 = vpack.c.b16 %v1161, %v1161
      %v1194 = vpack.c.b16 %v1162, %v1162
      %v1195 = vpack.c.b16 %v1163, %v1163
      %v1196 = vpack.c.b16 %v1164, %v1164
      %v1197 = vpack.c.b16 %v1165, %v1165
      %v1198 = vpack.c.b16 %v1166, %v1166
      %v1199 = vpack.c.b16 %v1167, %v1167
      %v1200 = vpack.c.b16 %v1168, %v1168
      %v1201 = vpack.c.b16 %v1169, %v1169
      %v1202 = vpack.c.b16 %v1170, %v1170
      %v1203 = vpack.c.b16 %v1171, %v1171
      %v1204 = vpack.c.b16 %v1172, %v1172
      %v1205 = vpack.c.b16 %v1173, %v1173
      %v1206 = vpack.c.b16 %v1174, %v1174
      %v1207 = vpack.c.b16 %v1175, %v1175
      %v1208 = vpack.c.b16 %v1176, %v1176
      %1241 = vst [vmem:[#allocation6] sm:$0xf] %v1177
      %1242 = vst [vmem:[#allocation6 + $0x4] sm:$0xf] %v1178
      %1243 = vst [vmem:[#allocation6 + $0x8] sm:$0xf] %v1179
      %1244 = vst [vmem:[#allocation6 + $0xc] sm:$0xf] %v1180
      %1245 = vst [vmem:[#allocation6 + $0x10] sm:$0xf] %v1181
      %1246 = vst [vmem:[#allocation6 + $0x14] sm:$0xf] %v1182
      %1247 = vst [vmem:[#allocation6 + $0x18] sm:$0xf] %v1183
      %1248 = vst [vmem:[#allocation6 + $0x1c] sm:$0xf] %v1184
      %1249 = vst [vmem:[#allocation6 + $0x20] sm:$0xf] %v1185
      %1250 = vst [vmem:[#allocation6 + $0x24] sm:$0xf] %v1186
      %1251 = vst [vmem:[#allocation6 + $0x28] sm:$0xf] %v1187
      %1252 = vst [vmem:[#allocation6 + $0x2c] sm:$0xf] %v1188
      %1253 = vst [vmem:[#allocation6 + $0x30] sm:$0xf] %v1189
      %1254 = vst [vmem:[#allocation6 + $0x34] sm:$0xf] %v1190
      %1255 = vst [vmem:[#allocation6 + $0x38] sm:$0xf] %v1191
      %1256 = vst [vmem:[#allocation6 + $0x3c] sm:$0xf] %v1192
      %1257 = vst [vmem:[#allocation6 + $0x40] sm:$0xf] %v1193
      %1258 = vst [vmem:[#allocation6 + $0x44] sm:$0xf] %v1194
      %1259 = vst [vmem:[#allocation6 + $0x48] sm:$0xf] %v1195
      %1260 = vst [vmem:[#allocation6 + $0x4c] sm:$0xf] %v1196
      %1261 = vst [vmem:[#allocation6 + $0x50] sm:$0xf] %v1197
      %1262 = vst [vmem:[#allocation6 + $0x54] sm:$0xf] %v1198
      %1263 = vst [vmem:[#allocation6 + $0x58] sm:$0xf] %v1199
      %1264 = vst [vmem:[#allocation6 + $0x5c] sm:$0xf] %v1200
      %1265 = vst [vmem:[#allocation6 + $0x60] sm:$0xf] %v1201
      %1266 = vst [vmem:[#allocation6 + $0x64] sm:$0xf] %v1202
      %1267 = vst [vmem:[#allocation6 + $0x68] sm:$0xf] %v1203
      %1268 = vst [vmem:[#allocation6 + $0x6c] sm:$0xf] %v1204
      %1269 = vst [vmem:[#allocation6 + $0x70] sm:$0xf] %v1205
      %1270 = vst [vmem:[#allocation6 + $0x74] sm:$0xf] %v1206
      %1271 = vst [vmem:[#allocation6 + $0x78] sm:$0xf] %v1207
      %1272 = vst [vmem:[#allocation6 + $0x7c] sm:$0xf] %v1208
    $region33: #{tpu_custom_call.1} parent=1 // pred_fallthru
      _
    // Predicated region
    $region34: #{tpu_custom_call.1} parent=1 // pred_check
      _
    $region35: #{tpu_custom_call.1} parent=1 // pred_check_branch
      %1274 = sbr.rel (0) target = $region37
    $region36: #{tpu_custom_call.1} parent=1 // pred_region
      %s1276 = ssub.s32 2048, 2048
      %1277 = vsyncadd [#allocation5], %s1276
      %s1278 = sshll.u32 [#allocation6], 4
      %s1279 = int_to_ptr.vmem [resolvable:$true] %s1278
      %1284 = dma.vmem_to_hbm [thread:$0]  %s1279, 2048, %s5, [#allocation5], 64, 64, 4
    $region37: #{tpu_custom_call.1} parent=1 // pred_fallthru
      _
    // Predicated region
    $region38: #{tpu_custom_call.1} parent=1 // pred_check
      _
    $region39: #{tpu_custom_call.1} parent=1 // pred_check_branch
      %1286 = sbr.rel (0) target = $region41
    $region40: #{tpu_custom_call.1} parent=1 // pred_region
      %1287 = dma.done [#allocation5], 2048
    $region41: #{tpu_custom_call.1} parent=1 // pred_fallthru
      _
    %1288 = vsyncpa [#allocation4], 1
    %1289 = vsyncpa [#allocation5], 1

</llo_original>
